<compile_context>
chip_gen: v7x
topology: tpu7x:2x2x1
jax: 0.10.0
libtpu: 0.0.40
codegen_flags: <defaults>
</compile_context>

<pallas_src>
import functools

import jax
import jax.numpy as jnp
from jax.experimental import pallas as pl
from jax.experimental.pallas import tpu as pltpu

LANES = 128          # TPU vreg lane width
NEG_SLOPE = 0.01     # torch.nn.functional.leaky_relu default negative_slope


def _disnet_kernel(hidden_dim, w1_ref, b1_ref, w3_ref, e_ref, x_ref, o_ref):
    """Fused L1 -> leaky_relu -> L3 -> leaky_relu on a lane-dense batch slab.

    x_ref / o_ref : (tr, 128) f32 VMEM tiles (each element = one batch sample).
    w1/b1/w3      : SMEM (H,) vectors of the tiny Linear parameters (scalar reads).
    e_ref         : SMEM (3,) precomputed epilogue scalars [s*A, s*C + b3, 1-s].
    """
    x = x_ref[...]                                       # (tr, 128)
    acc = jnp.zeros_like(x)
    # hidden_dim = 10: short static unroll, pure VPU work (no MXU / XLU needed).
    for j in range(hidden_dim):
        h = x * w1_ref[j] + b1_ref[j]                    # L1 pre-activation, unit j
        acc = acc + w3_ref[j] * jnp.maximum(h, 0.0)      # relu part of leaky * w3_j
    # out_pre = (s*A)*x + (s*C + b3) + (1-s)*acc  (linear part of leaky folded in)
    out_pre = e_ref[0] * x + e_ref[1] + e_ref[2] * acc
    # final leaky_relu:  max(y, s*y) == leaky_relu(y) for 0 < s < 1
    o_ref[...] = jnp.maximum(out_pre, NEG_SLOPE * out_pre).astype(o_ref.dtype)


def disnet_forward(x, w1, b1, w3, b3, *, rows_per_tile=2048):
    """DisNet.forward. Weights use (in, out) layout (transpose of torch.nn.Linear.weight).

    x : (B, 1) f32.   Returns (B, 1) f32.
    """
    B, in_features = x.shape
    assert in_features == 1, "DisNet.L1 is Linear(1, hidden_dim)"
    H = w1.shape[1]

    # ---- lane-dense batch slab: (rows, 128) so all stores are full vregs ----
    rows = -(-B // LANES)                     # ceil(B / 128)
    b128 = rows * LANES                       # pad only to the next multiple of 128

    if rows <= rows_per_tile:
        tr = rows                             # single full-extent block (any row count)
    else:
        tr = max(8, (rows_per_tile // 8) * 8)  # sublane multiple of 8
    grid = (pl.cdiv(rows, tr),)               # ragged last block masked by Pallas

    x_flat = x.reshape(B)
    if b128 != B:                             # no extra HBM pass when B % 128 == 0
        x_flat = jnp.pad(x_flat, (0, b128 - B))
    x_dense = x_flat.reshape(rows, LANES)

    # Tiny parameters as flat SMEM vectors (read as scalars inside the kernel).
    w1_s = w1.reshape(H).astype(jnp.float32)
    b1_s = b1.reshape(H).astype(jnp.float32)
    w3_s = w3.reshape(H).astype(jnp.float32)
    b3_s = b3.reshape(-1).astype(jnp.float32)

    # Precompute epilogue scalars of the leaky decomposition.
    s = jnp.float32(NEG_SLOPE)
    A = jnp.sum(w3_s * w1_s)                  # sum_j w3_j * w1_j
    C = jnp.sum(w3_s * b1_s)                  # sum_j w3_j * b1_j
    extras = jnp.stack([s * A, s * C + b3_s[0], jnp.float32(1.0) - s]).astype(jnp.float32)

    flops = B * (5 * H + 8)
    bytes_accessed = 4 * (2 * b128 + 3 * H + 3)

    out_dense = pl.pallas_call(
        functools.partial(_disnet_kernel, H),
        out_shape=jax.ShapeDtypeStruct((rows, LANES), jnp.float32),
        grid_spec=pltpu.PrefetchScalarGridSpec(
            num_scalar_prefetch=0,
            grid=grid,
            in_specs=[
                pl.BlockSpec(memory_space=pltpu.MemorySpace.SMEM),   # w1 (H,)
                pl.BlockSpec(memory_space=pltpu.MemorySpace.SMEM),   # b1 (H,)
                pl.BlockSpec(memory_space=pltpu.MemorySpace.SMEM),   # w3 (H,)
                pl.BlockSpec(memory_space=pltpu.MemorySpace.SMEM),   # extras (3,)
                pl.BlockSpec((tr, LANES), lambda i: (i, 0)),         # x slab tile
            ],
            out_specs=pl.BlockSpec((tr, LANES), lambda i: (i, 0)),   # out slab tile
        ),
        compiler_params=pltpu.CompilerParams(
            dimension_semantics=("parallel",)),      # batch tiles independent; 2 TCs on v7x
        cost_estimate=pl.CostEstimate(
            flops=flops, transcendentals=0, bytes_accessed=bytes_accessed),
    )(w1_s, b1_s, w3_s, extras, x_dense)

    if b128 == B:                               # aligned batch: no slice copy at all
        return out_dense.reshape(B, 1)
    return out_dense.reshape(b128)[:B].reshape(B, 1)


def _init_linear(key, fan_in, fan_out):
    """Deterministic init mimicking torch.nn.Linear's uniform(-1/sqrt(fan_in))."""
    kw, kb = jax.random.split(key)
    bound = 1.0 / float(fan_in) ** 0.5
    w = jax.random.uniform(kw, (fan_in, fan_out), jnp.float32, -bound, bound)
    b = jax.random.uniform(kb, (fan_out,), jnp.float32, -bound, bound)
    return w, b


def _leaky(v):
    return jnp.where(v >= 0.0, v, NEG_SLOPE * v)


def _reference(x, w1, b1, w3, b3):
    H = w1.shape[1]
    h = _leaky(x * w1.reshape(1, H) + b1.reshape(1, H))                     # L1 + leaky
    return _leaky(jnp.sum(h * w3.reshape(1, H), axis=-1, keepdims=True)
                  + b3.reshape(1, 1))                                       # L3 + leaky


if __name__ == "__main__":
    key = jax.random.PRNGKey(0)
    k_x, k1, k2, k3 = jax.random.split(key, 4)

    HIDDEN_DIM = 10          # matches `hidden_dim = 10` in the PyTorch source
    BATCH = 200              # small, non-multiple-of-128 batch (exercises padding)

    x = jax.random.normal(k_x, (BATCH, 1), jnp.float32)
    w1, b1 = _init_linear(k1, 1, HIDDEN_DIM)            # L1: Linear(1, hidden)
    w2, b2 = _init_linear(k2, HIDDEN_DIM, HIDDEN_DIM)   # L2: declared but unused in forward
    w3, b3 = _init_linear(k3, HIDDEN_DIM, 1)            # L3: Linear(hidden, 1)
    # TODO(synk): self.L2 is never applied in DisNet.forward, so it is not computed here.

    # 1) Small non-aligned batch (single full-extent tile + pad/slice path).
    out = disnet_forward(x, w1, b1, w3, b3)
    jax.block_until_ready(out)
    ref = _reference(x, w1, b1, w3, b3)
    assert out.shape == (BATCH, 1)
    assert jnp.allclose(out, ref, atol=1e-5), float(jnp.max(jnp.abs(out - ref)))

    # 2) 128-aligned batch: zero wrapper pad/slice copies.
    BATCH_ALIGNED = 1024
    xa = jax.random.normal(k_x, (BATCH_ALIGNED, 1), jnp.float32)
    outa = disnet_forward(xa, w1, b1, w3, b3)
    jax.block_until_ready(outa)
    refa = _reference(xa, w1, b1, w3, b3)
    assert outa.shape == (BATCH_ALIGNED, 1)
    assert jnp.allclose(outa, refa, atol=1e-5), float(jnp.max(jnp.abs(outa - refa)))

    # 3) Multi-tile pipelined path with a ragged last block (test-only tiny tiles
    #    to force grid > 1 at a small batch; production uses the 2048-row default).
    BATCH2 = 2500
    x2 = jax.random.normal(k_x, (BATCH2, 1), jnp.float32)
    out2 = disnet_forward(x2, w1, b1, w3, b3, rows_per_tile=8)
    jax.block_until_ready(out2)
    ref2 = _reference(x2, w1, b1, w3, b3)
    assert out2.shape == (BATCH2, 1)
    assert jnp.allclose(out2, ref2, atol=1e-5), float(jnp.max(jnp.abs(out2 - ref2)))

    print("KERNEL_OK")
</pallas_src>

<mosaic_0001>
module attributes {stable_mosaic.version = 11 : i64} {
  func.func @_disnet_kernel(%arg0: i32, %arg1: memref<10xf32, #tpu.memory_space<smem>>, %arg2: memref<10xf32, #tpu.memory_space<smem>>, %arg3: memref<10xf32, #tpu.memory_space<smem>>, %arg4: memref<3xf32, #tpu.memory_space<smem>>, %arg5: memref<2x128xf32, #tpu.memory_space<vmem>>, %arg6: memref<2x128xf32, #tpu.memory_space<vmem>>) attributes {dimension_semantics = [#tpu.dimension_semantics<parallel>], iteration_bounds = array<i64: 1>, scalar_prefetch = 0 : i64, scratch_operands = 0 : i64, tpu.core_type = #tpu.core_type<tc>, window_params = [{transform_indices = @transform_0, window_bounds = array<i64: 10>}, {transform_indices = @transform_1, window_bounds = array<i64: 10>}, {transform_indices = @transform_2, window_bounds = array<i64: 10>}, {transform_indices = @transform_3, window_bounds = array<i64: 3>}, {transform_indices = @transform_4, window_bounds = array<i64: 2, 128>}, {transform_indices = @transform_5, window_bounds = array<i64: 2, 128>}]} {
    %c0 = arith.constant 0 : index
    %c0_0 = arith.constant 0 : index
    %0 = vector.load %arg5[%c0, %c0_0] : memref<2x128xf32, #tpu.memory_space<vmem>>, vector<2x128xf32>
    %cst = arith.constant 0.000000e+00 : f32
    %1 = vector.broadcast %cst : f32 to vector<2x128xf32>
    %c0_1 = arith.constant 0 : index
    %2 = memref.load %arg1[%c0_1] : memref<10xf32, #tpu.memory_space<smem>>
    %3 = vector.broadcast %2 : f32 to vector<2x128xf32>
    %4 = arith.mulf %0, %3 : vector<2x128xf32>
    %c0_2 = arith.constant 0 : index
    %5 = memref.load %arg2[%c0_2] : memref<10xf32, #tpu.memory_space<smem>>
    %6 = vector.broadcast %5 : f32 to vector<2x128xf32>
    %7 = arith.addf %4, %6 : vector<2x128xf32>
    %c0_3 = arith.constant 0 : index
    %8 = memref.load %arg3[%c0_3] : memref<10xf32, #tpu.memory_space<smem>>
    %cst_4 = arith.constant 0.000000e+00 : f32
    %9 = vector.broadcast %cst_4 : f32 to vector<2x128xf32>
    %10 = arith.maximumf %7, %9 : vector<2x128xf32>
    %11 = vector.broadcast %8 : f32 to vector<2x128xf32>
    %12 = arith.mulf %11, %10 : vector<2x128xf32>
    %13 = arith.addf %1, %12 : vector<2x128xf32>
    %c1 = arith.constant 1 : index
    %14 = memref.load %arg1[%c1] : memref<10xf32, #tpu.memory_space<smem>>
    %15 = vector.broadcast %14 : f32 to vector<2x128xf32>
    %16 = arith.mulf %0, %15 : vector<2x128xf32>
    %c1_5 = arith.constant 1 : index
    %17 = memref.load %arg2[%c1_5] : memref<10xf32, #tpu.memory_space<smem>>
    %18 = vector.broadcast %17 : f32 to vector<2x128xf32>
    %19 = arith.addf %16, %18 : vector<2x128xf32>
    %c1_6 = arith.constant 1 : index
    %20 = memref.load %arg3[%c1_6] : memref<10xf32, #tpu.memory_space<smem>>
    %cst_7 = arith.constant 0.000000e+00 : f32
    %21 = vector.broadcast %cst_7 : f32 to vector<2x128xf32>
    %22 = arith.maximumf %19, %21 : vector<2x128xf32>
    %23 = vector.broadcast %20 : f32 to vector<2x128xf32>
    %24 = arith.mulf %23, %22 : vector<2x128xf32>
    %25 = arith.addf %13, %24 : vector<2x128xf32>
    %c2 = arith.constant 2 : index
    %26 = memref.load %arg1[%c2] : memref<10xf32, #tpu.memory_space<smem>>
    %27 = vector.broadcast %26 : f32 to vector<2x128xf32>
    %28 = arith.mulf %0, %27 : vector<2x128xf32>
    %c2_8 = arith.constant 2 : index
    %29 = memref.load %arg2[%c2_8] : memref<10xf32, #tpu.memory_space<smem>>
    %30 = vector.broadcast %29 : f32 to vector<2x128xf32>
    %31 = arith.addf %28, %30 : vector<2x128xf32>
    %c2_9 = arith.constant 2 : index
    %32 = memref.load %arg3[%c2_9] : memref<10xf32, #tpu.memory_space<smem>>
    %cst_10 = arith.constant 0.000000e+00 : f32
    %33 = vector.broadcast %cst_10 : f32 to vector<2x128xf32>
    %34 = arith.maximumf %31, %33 : vector<2x128xf32>
    %35 = vector.broadcast %32 : f32 to vector<2x128xf32>
    %36 = arith.mulf %35, %34 : vector<2x128xf32>
    %37 = arith.addf %25, %36 : vector<2x128xf32>
    %c3 = arith.constant 3 : index
    %38 = memref.load %arg1[%c3] : memref<10xf32, #tpu.memory_space<smem>>
    %39 = vector.broadcast %38 : f32 to vector<2x128xf32>
    %40 = arith.mulf %0, %39 : vector<2x128xf32>
    %c3_11 = arith.constant 3 : index
    %41 = memref.load %arg2[%c3_11] : memref<10xf32, #tpu.memory_space<smem>>
    %42 = vector.broadcast %41 : f32 to vector<2x128xf32>
    %43 = arith.addf %40, %42 : vector<2x128xf32>
    %c3_12 = arith.constant 3 : index
    %44 = memref.load %arg3[%c3_12] : memref<10xf32, #tpu.memory_space<smem>>
    %cst_13 = arith.constant 0.000000e+00 : f32
    %45 = vector.broadcast %cst_13 : f32 to vector<2x128xf32>
    %46 = arith.maximumf %43, %45 : vector<2x128xf32>
    %47 = vector.broadcast %44 : f32 to vector<2x128xf32>
    %48 = arith.mulf %47, %46 : vector<2x128xf32>
    %49 = arith.addf %37, %48 : vector<2x128xf32>
    %c4 = arith.constant 4 : index
    %50 = memref.load %arg1[%c4] : memref<10xf32, #tpu.memory_space<smem>>
    %51 = vector.broadcast %50 : f32 to vector<2x128xf32>
    %52 = arith.mulf %0, %51 : vector<2x128xf32>
    %c4_14 = arith.constant 4 : index
    %53 = memref.load %arg2[%c4_14] : memref<10xf32, #tpu.memory_space<smem>>
    %54 = vector.broadcast %53 : f32 to vector<2x128xf32>
    %55 = arith.addf %52, %54 : vector<2x128xf32>
    %c4_15 = arith.constant 4 : index
    %56 = memref.load %arg3[%c4_15] : memref<10xf32, #tpu.memory_space<smem>>
    %cst_16 = arith.constant 0.000000e+00 : f32
    %57 = vector.broadcast %cst_16 : f32 to vector<2x128xf32>
    %58 = arith.maximumf %55, %57 : vector<2x128xf32>
    %59 = vector.broadcast %56 : f32 to vector<2x128xf32>
    %60 = arith.mulf %59, %58 : vector<2x128xf32>
    %61 = arith.addf %49, %60 : vector<2x128xf32>
    %c5 = arith.constant 5 : index
    %62 = memref.load %arg1[%c5] : memref<10xf32, #tpu.memory_space<smem>>
    %63 = vector.broadcast %62 : f32 to vector<2x128xf32>
    %64 = arith.mulf %0, %63 : vector<2x128xf32>
    %c5_17 = arith.constant 5 : index
    %65 = memref.load %arg2[%c5_17] : memref<10xf32, #tpu.memory_space<smem>>
    %66 = vector.broadcast %65 : f32 to vector<2x128xf32>
    %67 = arith.addf %64, %66 : vector<2x128xf32>
    %c5_18 = arith.constant 5 : index
    %68 = memref.load %arg3[%c5_18] : memref<10xf32, #tpu.memory_space<smem>>
    %cst_19 = arith.constant 0.000000e+00 : f32
    %69 = vector.broadcast %cst_19 : f32 to vector<2x128xf32>
    %70 = arith.maximumf %67, %69 : vector<2x128xf32>
    %71 = vector.broadcast %68 : f32 to vector<2x128xf32>
    %72 = arith.mulf %71, %70 : vector<2x128xf32>
    %73 = arith.addf %61, %72 : vector<2x128xf32>
    %c6 = arith.constant 6 : index
    %74 = memref.load %arg1[%c6] : memref<10xf32, #tpu.memory_space<smem>>
    %75 = vector.broadcast %74 : f32 to vector<2x128xf32>
    %76 = arith.mulf %0, %75 : vector<2x128xf32>
    %c6_20 = arith.constant 6 : index
    %77 = memref.load %arg2[%c6_20] : memref<10xf32, #tpu.memory_space<smem>>
    %78 = vector.broadcast %77 : f32 to vector<2x128xf32>
    %79 = arith.addf %76, %78 : vector<2x128xf32>
    %c6_21 = arith.constant 6 : index
    %80 = memref.load %arg3[%c6_21] : memref<10xf32, #tpu.memory_space<smem>>
    %cst_22 = arith.constant 0.000000e+00 : f32
    %81 = vector.broadcast %cst_22 : f32 to vector<2x128xf32>
    %82 = arith.maximumf %79, %81 : vector<2x128xf32>
    %83 = vector.broadcast %80 : f32 to vector<2x128xf32>
    %84 = arith.mulf %83, %82 : vector<2x128xf32>
    %85 = arith.addf %73, %84 : vector<2x128xf32>
    %c7 = arith.constant 7 : index
    %86 = memref.load %arg1[%c7] : memref<10xf32, #tpu.memory_space<smem>>
    %87 = vector.broadcast %86 : f32 to vector<2x128xf32>
    %88 = arith.mulf %0, %87 : vector<2x128xf32>
    %c7_23 = arith.constant 7 : index
    %89 = memref.load %arg2[%c7_23] : memref<10xf32, #tpu.memory_space<smem>>
    %90 = vector.broadcast %89 : f32 to vector<2x128xf32>
    %91 = arith.addf %88, %90 : vector<2x128xf32>
    %c7_24 = arith.constant 7 : index
    %92 = memref.load %arg3[%c7_24] : memref<10xf32, #tpu.memory_space<smem>>
    %cst_25 = arith.constant 0.000000e+00 : f32
    %93 = vector.broadcast %cst_25 : f32 to vector<2x128xf32>
    %94 = arith.maximumf %91, %93 : vector<2x128xf32>
    %95 = vector.broadcast %92 : f32 to vector<2x128xf32>
    %96 = arith.mulf %95, %94 : vector<2x128xf32>
    %97 = arith.addf %85, %96 : vector<2x128xf32>
    %c8 = arith.constant 8 : index
    %98 = memref.load %arg1[%c8] : memref<10xf32, #tpu.memory_space<smem>>
    %99 = vector.broadcast %98 : f32 to vector<2x128xf32>
    %100 = arith.mulf %0, %99 : vector<2x128xf32>
    %c8_26 = arith.constant 8 : index
    %101 = memref.load %arg2[%c8_26] : memref<10xf32, #tpu.memory_space<smem>>
    %102 = vector.broadcast %101 : f32 to vector<2x128xf32>
    %103 = arith.addf %100, %102 : vector<2x128xf32>
    %c8_27 = arith.constant 8 : index
    %104 = memref.load %arg3[%c8_27] : memref<10xf32, #tpu.memory_space<smem>>
    %cst_28 = arith.constant 0.000000e+00 : f32
    %105 = vector.broadcast %cst_28 : f32 to vector<2x128xf32>
    %106 = arith.maximumf %103, %105 : vector<2x128xf32>
    %107 = vector.broadcast %104 : f32 to vector<2x128xf32>
    %108 = arith.mulf %107, %106 : vector<2x128xf32>
    %109 = arith.addf %97, %108 : vector<2x128xf32>
    %c9 = arith.constant 9 : index
    %110 = memref.load %arg1[%c9] : memref<10xf32, #tpu.memory_space<smem>>
    %111 = vector.broadcast %110 : f32 to vector<2x128xf32>
    %112 = arith.mulf %0, %111 : vector<2x128xf32>
    %c9_29 = arith.constant 9 : index
    %113 = memref.load %arg2[%c9_29] : memref<10xf32, #tpu.memory_space<smem>>
    %114 = vector.broadcast %113 : f32 to vector<2x128xf32>
    %115 = arith.addf %112, %114 : vector<2x128xf32>
    %c9_30 = arith.constant 9 : index
    %116 = memref.load %arg3[%c9_30] : memref<10xf32, #tpu.memory_space<smem>>
    %cst_31 = arith.constant 0.000000e+00 : f32
    %117 = vector.broadcast %cst_31 : f32 to vector<2x128xf32>
    %118 = arith.maximumf %115, %117 : vector<2x128xf32>
    %119 = vector.broadcast %116 : f32 to vector<2x128xf32>
    %120 = arith.mulf %119, %118 : vector<2x128xf32>
    %121 = arith.addf %109, %120 : vector<2x128xf32>
    %c0_32 = arith.constant 0 : index
    %122 = memref.load %arg4[%c0_32] : memref<3xf32, #tpu.memory_space<smem>>
    %123 = vector.broadcast %122 : f32 to vector<2x128xf32>
    %124 = arith.mulf %123, %0 : vector<2x128xf32>
    %c1_33 = arith.constant 1 : index
    %125 = memref.load %arg4[%c1_33] : memref<3xf32, #tpu.memory_space<smem>>
    %126 = vector.broadcast %125 : f32 to vector<2x128xf32>
    %127 = arith.addf %124, %126 : vector<2x128xf32>
    %c2_34 = arith.constant 2 : index
    %128 = memref.load %arg4[%c2_34] : memref<3xf32, #tpu.memory_space<smem>>
    %129 = vector.broadcast %128 : f32 to vector<2x128xf32>
    %130 = arith.mulf %129, %121 : vector<2x128xf32>
    %131 = arith.addf %127, %130 : vector<2x128xf32>
    %cst_35 = arith.constant 0.00999999977 : f32
    %132 = vector.broadcast %cst_35 : f32 to vector<2x128xf32>
    %133 = arith.mulf %132, %131 : vector<2x128xf32>
    %134 = arith.maximumf %131, %133 : vector<2x128xf32>
    %c0_36 = arith.constant 0 : index
    %c0_37 = arith.constant 0 : index
    %135 = vector.load %arg6[%c0_36, %c0_37] : memref<2x128xf32, #tpu.memory_space<vmem>>, vector<2x128xf32>
    tpu.vector_store %arg6[%c0_36, %c0_37], %134 {strides = array<i32>} : memref<2x128xf32, #tpu.memory_space<vmem>>, vector<2x128xf32>,
    return
  }
  func.func @transform_0(%arg0: i32) -> i32 {
    %c0_i32 = arith.constant 0 : i32
    %c0_i32_0 = arith.constant 0 : i32
    return %c0_i32 : i32
  }
  func.func @transform_1(%arg0: i32) -> i32 {
    %c0_i32 = arith.constant 0 : i32
    %c0_i32_0 = arith.constant 0 : i32
    return %c0_i32 : i32
  }
  func.func @transform_2(%arg0: i32) -> i32 {
    %c0_i32 = arith.constant 0 : i32
    %c0_i32_0 = arith.constant 0 : i32
    return %c0_i32 : i32
  }
  func.func @transform_3(%arg0: i32) -> i32 {
    %c0_i32 = arith.constant 0 : i32
    %c0_i32_0 = arith.constant 0 : i32
    return %c0_i32 : i32
  }
  func.func @transform_4(%arg0: i32) -> (i32, i32) {
    %c0_i32 = arith.constant 0 : i32
    %c0_i32_0 = arith.constant 0 : i32
    return %arg0, %c0_i32 : i32, i32
  }
  func.func @transform_5(%arg0: i32) -> (i32, i32) {
    %c0_i32 = arith.constant 0 : i32
    %c0_i32_0 = arith.constant 0 : i32
    return %arg0, %c0_i32 : i32, i32
  }
}

</mosaic_0001>

<llo_original>
// kernel: tpu_custom_call.1
$region0: #{tpu_custom_call.1}
  #allocation0 [shape = 'u32[]', space=smem, size = 0x4, offset = 0x4, fixed_abs, tag = 'smem constant byte address 0x4 - core index']
  #allocation1 [shape = 'u32[144,128]{1,0:T(1,128)}', space=vmem, size = 0x12000, scoped, tag = 'internal scratch']
  %s0 = inlined_call_operand.hbm [shape: f32[10], index: 0, kind: input, shape index: {}]
  %s1 = inlined_call_operand.vmem [shape: f32[10], index: 1, kind: input, shape index: {}]
  %s2 = inlined_call_operand.vmem [shape: f32[10], index: 2, kind: input, shape index: {}]
  %s3 = inlined_call_operand.vmem [shape: f32[3], index: 3, kind: input, shape index: {}]
  %s4 = inlined_call_operand.vmem [shape: f32[2,128], index: 4, kind: input, shape index: {}]
  %s5 = inlined_call_operand.hbm [shape: f32[2,128], index: 5, kind: output, shape index: {}]
  %s6 = sld [smem:[#allocation0]]
  $region46: #{tpu_custom_call.1} parent=0
    _
  %s8 = ssub.s32 1, %s6
  %s9 = scalar_select 0, %s8, %s6
  $region1: #{tpu_custom_call.1} parent=0
    #allocation2 [shape = 'u8[512]{0}', space=smem, size = 0x200, scoped, tag = 'input window, operand 0, single buffered']
    #allocation3 [shape = 's32[1]{0}', space=sflag, size = 0x4, scoped, tag = 'scoped memory for tpu_custom_call.1']
    #allocation4 [shape = 's32[1]{0}', space=sflag, size = 0x4, scoped, tag = 'scoped memory for tpu_custom_call.1']
    #allocation5 [shape = 's32[1]{0}', space=sflag, size = 0x4, scoped, tag = 'scoped memory for tpu_custom_call.1']
    #allocation6 [shape = 'u8[512]{0}', space=smem, size = 0x200, scoped, tag = 'input window, operand 1, single buffered']
    #allocation7 [shape = 'u8[512]{0}', space=smem, size = 0x200, scoped, tag = 'input window, operand 2, single buffered']
    #allocation8 [shape = 's32[1]{0}', space=sflag, size = 0x4, scoped, tag = 'scoped memory for tpu_custom_call.1']
    #allocation9 [shape = 'u8[512]{0}', space=smem, size = 0x200, scoped, tag = 'input window, operand 3, single buffered']
    #allocation10 [shape = 'u8[1024]{0}', space=vmem, size = 0x400, scoped, tag = 'output window, operand 0, single buffered']
    %10 = vsyncpa [#allocation4], 0
    %11 = vsyncpa [#allocation5], 0
    %12 = vsyncpa [#allocation8], 0
    %13 = vsyncpa [#allocation3], 0
    // Predicated region
    $region2: #{tpu_custom_call.1} parent=1 // pred_check
      _
    $region3: #{tpu_custom_call.1} parent=1 // pred_check_branch
      %15 = sbr.rel (0) target = $region5
    $region4: #{tpu_custom_call.1} parent=1 // pred_region
      %s17 = ssub.s32 16, 16
      %18 = vsyncadd [#allocation4], %s17
      %21 = dma.hbm_to_smem %s0, 16, [#allocation2], [#allocation4]
    $region5: #{tpu_custom_call.1} parent=1 // pred_fallthru
      _
    // Predicated region
    $region6: #{tpu_custom_call.1} parent=1 // pred_check
      _
    $region7: #{tpu_custom_call.1} parent=1 // pred_check_branch
      %23 = sbr.rel (0) target = $region9
    $region8: #{tpu_custom_call.1} parent=1 // pred_region
      %s25 = ssub.s32 16, 16
      %26 = vsyncadd [#allocation5], %s25
      %s28 = sshll.u32 %s1, 4
      %s29 = int_to_ptr.vmem [resolvable:$true] %s28
      %31 = dma.vmem_to_smem %s29, 16, [#allocation6], [#allocation5]
    $region9: #{tpu_custom_call.1} parent=1 // pred_fallthru
      _
    // Predicated region
    $region10: #{tpu_custom_call.1} parent=1 // pred_check
      _
    $region11: #{tpu_custom_call.1} parent=1 // pred_check_branch
      %33 = sbr.rel (0) target = $region13
    $region12: #{tpu_custom_call.1} parent=1 // pred_region
      %s35 = ssub.s32 16, 16
      %36 = vsyncadd [#allocation8], %s35
      %s38 = sshll.u32 %s2, 4
      %s39 = int_to_ptr.vmem [resolvable:$true] %s38
      %41 = dma.vmem_to_smem %s39, 16, [#allocation7], [#allocation8]
    $region13: #{tpu_custom_call.1} parent=1 // pred_fallthru
      _
    // Predicated region
    $region14: #{tpu_custom_call.1} parent=1 // pred_check
      _
    $region15: #{tpu_custom_call.1} parent=1 // pred_check_branch
      %43 = sbr.rel (0) target = $region17
    $region16: #{tpu_custom_call.1} parent=1 // pred_region
      %s45 = ssub.s32 16, 16
      %46 = vsyncadd [#allocation8], %s45
      %s48 = sshll.u32 %s3, 4
      %s49 = int_to_ptr.vmem [resolvable:$true] %s48
      %51 = dma.vmem_to_smem %s49, 16, [#allocation9], [#allocation8]
    $region17: #{tpu_custom_call.1} parent=1 // pred_fallthru
      _
    // Predicated region
    $region18: #{tpu_custom_call.1} parent=1 // pred_check
      _
    $region19: #{tpu_custom_call.1} parent=1 // pred_check_branch
      %53 = sbr.rel (0) target = $region21
    $region20: #{tpu_custom_call.1} parent=1 // pred_region
      _
    $region21: #{tpu_custom_call.1} parent=1 // pred_fallthru
      _
    // Predicated region
    $region22: #{tpu_custom_call.1} parent=1 // pred_check
      _
    $region23: #{tpu_custom_call.1} parent=1 // pred_check_branch
      %55 = sbr.rel (0) target = $region25
    $region24: #{tpu_custom_call.1} parent=1 // pred_region
      %56 = dma.done [#allocation4], 16
    $region25: #{tpu_custom_call.1} parent=1 // pred_fallthru
      _
    // Predicated region
    $region26: #{tpu_custom_call.1} parent=1 // pred_check
      _
    $region27: #{tpu_custom_call.1} parent=1 // pred_check_branch
      %58 = sbr.rel (0) target = $region29
    $region28: #{tpu_custom_call.1} parent=1 // pred_region
      %59 = dma.done [#allocation5], 16
    $region29: #{tpu_custom_call.1} parent=1 // pred_fallthru
      _
    // Predicated region
    $region30: #{tpu_custom_call.1} parent=1 // pred_check
      _
    $region31: #{tpu_custom_call.1} parent=1 // pred_check_branch
      %61 = sbr.rel (0) target = $region33
    $region32: #{tpu_custom_call.1} parent=1 // pred_region
      %62 = dma.done [#allocation8], 16
    $region33: #{tpu_custom_call.1} parent=1 // pred_fallthru
      _
    // Predicated region
    $region34: #{tpu_custom_call.1} parent=1 // pred_check
      _
    $region35: #{tpu_custom_call.1} parent=1 // pred_check_branch
      %64 = sbr.rel (0) target = $region37
    $region36: #{tpu_custom_call.1} parent=1 // pred_region
      %65 = dma.done [#allocation8], 16
    $region37: #{tpu_custom_call.1} parent=1 // pred_fallthru
      _
    %66 = sfence
    %v67 = vld [vmem:[%s4] sm:$0x3]
    %s68 = sld [smem:[#allocation2]]
    %v69 = vstv %s68
    %v70 = vmul.f32 %v67, %v69
    %s71 = sld [smem:[#allocation6]]
    %v72 = vstv %s71
    %v73 = vadd.f32 %v70, %v72
    %s74 = sld [smem:[#allocation7]]
    %v75 = vmax.f32 %v73, 0.0
    %v76 = vstv %s74
    %v77 = vmul.f32 %v76, %v75
    %v78 = vadd.f32 %v77, 0.0
    %s79 = sld [smem:[#allocation2 + $0x1]]
    %v80 = vstv %s79
    %v81 = vmul.f32 %v67, %v80
    %s82 = sld [smem:[#allocation6 + $0x1]]
    %v83 = vstv %s82
    %v84 = vadd.f32 %v81, %v83
    %s85 = sld [smem:[#allocation7 + $0x1]]
    %v86 = vmax.f32 %v84, 0.0
    %v87 = vstv %s85
    %v88 = vmul.f32 %v87, %v86
    %v89 = vadd.f32 %v78, %v88
    %s90 = sld [smem:[#allocation2 + $0x2]]
    %v91 = vstv %s90
    %v92 = vmul.f32 %v67, %v91
    %s93 = sld [smem:[#allocation6 + $0x2]]
    %v94 = vstv %s93
    %v95 = vadd.f32 %v92, %v94
    %s96 = sld [smem:[#allocation7 + $0x2]]
    %v97 = vmax.f32 %v95, 0.0
    %v98 = vstv %s96
    %v99 = vmul.f32 %v98, %v97
    %v100 = vadd.f32 %v89, %v99
    %s101 = sld [smem:[#allocation2 + $0x3]]
    %v102 = vstv %s101
    %v103 = vmul.f32 %v67, %v102
    %s104 = sld [smem:[#allocation6 + $0x3]]
    %v105 = vstv %s104
    %v106 = vadd.f32 %v103, %v105
    %s107 = sld [smem:[#allocation7 + $0x3]]
    %v108 = vmax.f32 %v106, 0.0
    %v109 = vstv %s107
    %v110 = vmul.f32 %v109, %v108
    %v111 = vadd.f32 %v100, %v110
    %s112 = sld [smem:[#allocation2 + $0x4]]
    %v113 = vstv %s112
    %v114 = vmul.f32 %v67, %v113
    %s115 = sld [smem:[#allocation6 + $0x4]]
    %v116 = vstv %s115
    %v117 = vadd.f32 %v114, %v116
    %s118 = sld [smem:[#allocation7 + $0x4]]
    %v119 = vmax.f32 %v117, 0.0
    %v120 = vstv %s118
    %v121 = vmul.f32 %v120, %v119
    %v122 = vadd.f32 %v111, %v121
    %s123 = sld [smem:[#allocation2 + $0x5]]
    %v124 = vstv %s123
    %v125 = vmul.f32 %v67, %v124
    %s126 = sld [smem:[#allocation6 + $0x5]]
    %v127 = vstv %s126
    %v128 = vadd.f32 %v125, %v127
    %s129 = sld [smem:[#allocation7 + $0x5]]
    %v130 = vmax.f32 %v128, 0.0
    %v131 = vstv %s129
    %v132 = vmul.f32 %v131, %v130
    %v133 = vadd.f32 %v122, %v132
    %s134 = sld [smem:[#allocation2 + $0x6]]
    %v135 = vstv %s134
    %v136 = vmul.f32 %v67, %v135
    %s137 = sld [smem:[#allocation6 + $0x6]]
    %v138 = vstv %s137
    %v139 = vadd.f32 %v136, %v138
    %s140 = sld [smem:[#allocation7 + $0x6]]
    %v141 = vmax.f32 %v139, 0.0
    %v142 = vstv %s140
    %v143 = vmul.f32 %v142, %v141
    %v144 = vadd.f32 %v133, %v143
    %s145 = sld [smem:[#allocation2 + $0x7]]
    %v146 = vstv %s145
    %v147 = vmul.f32 %v67, %v146
    %s148 = sld [smem:[#allocation6 + $0x7]]
    %v149 = vstv %s148
    %v150 = vadd.f32 %v147, %v149
    %s151 = sld [smem:[#allocation7 + $0x7]]
    %v152 = vmax.f32 %v150, 0.0
    %v153 = vstv %s151
    %v154 = vmul.f32 %v153, %v152
    %v155 = vadd.f32 %v144, %v154
    %s156 = sld [smem:[#allocation2 + $0x8]]
    %v157 = vstv %s156
    %v158 = vmul.f32 %v67, %v157
    %s159 = sld [smem:[#allocation6 + $0x8]]
    %v160 = vstv %s159
    %v161 = vadd.f32 %v158, %v160
    %s162 = sld [smem:[#allocation7 + $0x8]]
    %v163 = vmax.f32 %v161, 0.0
    %v164 = vstv %s162
    %v165 = vmul.f32 %v164, %v163
    %v166 = vadd.f32 %v155, %v165
    %s167 = sld [smem:[#allocation2 + $0x9]]
    %v168 = vstv %s167
    %v169 = vmul.f32 %v67, %v168
    %s170 = sld [smem:[#allocation6 + $0x9]]
    %v171 = vstv %s170
    %v172 = vadd.f32 %v169, %v171
    %s173 = sld [smem:[#allocation7 + $0x9]]
    %v174 = vmax.f32 %v172, 0.0
    %v175 = vstv %s173
    %v176 = vmul.f32 %v175, %v174
    %v177 = vadd.f32 %v166, %v176
    %s178 = sld [smem:[#allocation9]]
    %v179 = vstv %s178
    %v180 = vmul.f32 %v179, %v67
    %s181 = sld [smem:[#allocation9 + $0x1]]
    %v182 = vstv %s181
    %v183 = vadd.f32 %v180, %v182
    %s184 = sld [smem:[#allocation9 + $0x2]]
    %v185 = vstv %s184
    %v186 = vmul.f32 %v185, %v177
    %v187 = vadd.f32 %v183, %v186
    %v188 = vmul.f32 %v187, 0.01
    %v189 = vmax.f32 %v187, %v188
    %190 = vst [vmem:[#allocation10] sm:$0x3] %v189
    // Predicated region
    $region38: #{tpu_custom_call.1} parent=1 // pred_check
      _
    $region39: #{tpu_custom_call.1} parent=1 // pred_check_branch
      %192 = sbr.rel (0) target = $region41
    $region40: #{tpu_custom_call.1} parent=1 // pred_region
      %s194 = ssub.s32 32, 32
      %195 = vsyncadd [#allocation3], %s194
      %s197 = sshll.u32 [#allocation10], 4
      %s198 = int_to_ptr.vmem [resolvable:$true] %s197
      %200 = dma.vmem_to_hbm [thread:$0]  %s198, 32, %s5, [#allocation3]
    $region41: #{tpu_custom_call.1} parent=1 // pred_fallthru
      _
    // Predicated region
    $region42: #{tpu_custom_call.1} parent=1 // pred_check
      _
    $region43: #{tpu_custom_call.1} parent=1 // pred_check_branch
      %202 = sbr.rel (0) target = $region45
    $region44: #{tpu_custom_call.1} parent=1 // pred_region
      %203 = dma.done [#allocation3], 32
    $region45: #{tpu_custom_call.1} parent=1 // pred_fallthru
      _
    %204 = vsyncpa [#allocation3], 1
    %205 = vsyncpa [#allocation4], 1
    %206 = vsyncpa [#allocation5], 1
    %207 = vsyncpa [#allocation8], 1

</llo_original>
